<compile_context>
chip_gen: v7x
topology: tpu7x:2x2x1
jax: 0.10.0
libtpu: 0.0.40
codegen_flags: <defaults>
</compile_context>

<pallas_src>
import functools

import jax
import jax.numpy as jnp
from jax.experimental import pallas as pl
from jax.experimental.pallas import tpu as pltpu


# ---------------------------------------------------------------------------
# Kernels
# ---------------------------------------------------------------------------
def _moe_dense_kernel(x_ref, nz_ref, w1_ref, b1_ref, w2_ref, b2_ref,
                      o_ref, acc_ref, *, activation):
    """Gating-disabled path: dispatch/combine are implicitly all-ones."""
    e = pl.program_id(1)
    f = pl.program_id(2)

    @pl.when((e == 0) & (f == 0))
    def _init():
        acc_ref[...] = jnp.zeros_like(acc_ref)

    # (TM, D) @ (D, TF) -> (TM, TF), f32 accumulation on the MXU.
    h = jnp.dot(x_ref[...], w1_ref[...], preferred_element_type=jnp.float32)
    # bias1 gated by the precomputed "token row sums to non-zero" mask.
    h = h + nz_ref[...] * b1_ref[...]
    h = activation(h)
    # (TM, TF) @ (TF, D) -> (TM, D), accumulated over experts and F chunks.
    acc_ref[...] += jnp.dot(h.astype(w2_ref.dtype), w2_ref[...],
                            preferred_element_type=jnp.float32)

    @pl.when((e == pl.num_programs(1) - 1) & (f == pl.num_programs(2) - 1))
    def _finalize():
        o_ref[...] = (acc_ref[...] + b2_ref[...]).astype(o_ref.dtype)


def _moe_gated_kernel(x_ref, disp_ref, comb_ref, w1_ref, b1_ref, w2_ref,
                      b2_ref, o_ref, acc_ref, *, combine_method, activation):
    """Full Experts semantics with per-token/per-expert dispatch & combine."""
    e = pl.program_id(1)
    f = pl.program_id(2)

    @pl.when((e == 0) & (f == 0))
    def _init():
        acc_ref[...] = jnp.zeros_like(acc_ref)

    xin = x_ref[...] * disp_ref[...]                       # (TM, D)
    h = jnp.dot(xin, w1_ref[...], preferred_element_type=jnp.float32)
    # Faithful to torch: bias1 only where the dispatched row sums to non-zero.
    nz = (jnp.sum(xin.astype(jnp.float32), axis=-1, keepdims=True) != 0.0
          ).astype(jnp.float32)
    h = h + nz * b1_ref[...]
    h = activation(h)
    out_e = jnp.dot(h.astype(w2_ref.dtype), w2_ref[...],
                    preferred_element_type=jnp.float32)
    if combine_method == "weighted_sum":
        out_e = out_e * comb_ref[...].astype(jnp.float32)
    acc_ref[...] += out_e

    @pl.when((e == pl.num_programs(1) - 1) & (f == pl.num_programs(2) - 1))
    def _finalize():
        o_ref[...] = (acc_ref[...] + b2_ref[...]).astype(o_ref.dtype)


# ---------------------------------------------------------------------------
# Wrapper
# ---------------------------------------------------------------------------
def _fit_tile(total, desired, quantum):
    """Largest multiple of `quantum` <= desired that divides `total`.
    Falls back to `total` (full extent always satisfies the layout rule)."""
    t = min(desired, total)
    t -= t % quantum
    while t >= quantum:
        if total % t == 0:
            return t
        t -= quantum
    return total


def moe_layer_forward(x, w1, b1, w2, b2, dispatch=None, combine=None,
                      combine_method="sum", *, tm=256, tf=512,
                      compute_dtype=jnp.bfloat16, activation=None):
    """MoELayer.forward.  dispatch/combine=None <=> gating disabled."""
    if activation is None:
        activation = functools.partial(jax.nn.gelu, approximate=True)
    B, N, D = x.shape
    E, _, F = w1.shape
    T = B * N

    TM = _fit_tile(T, tm, 8)        # token tile (sublane-aligned)
    TF = _fit_tile(F, tf, 128)      # expert-FF tile (lane-aligned)
    grid = (T // TM, E, F // TF)

    cd = jnp.dtype(compute_dtype)
    ob = jnp.dtype(x.dtype).itemsize

    xflat = x.reshape(T, D)
    x2 = xflat.astype(cd)
    w1c = w1.astype(cd)
    w2c = w2.astype(cd)
    b1r = b1.reshape(E, 1, F).astype(jnp.float32)
    b2r = b2.reshape(1, D).astype(jnp.float32)

    gated = (dispatch is not None) or (combine is not None)

    # VMEM budget (double-buffered inputs/outputs + resident f32 accumulator).
    per_step_in = ((TM * D + D * TF + TF * D) * cd.itemsize
                   + (TF + D) * 4 + TM * 8)
    vmem_est = 2 * per_step_in + 2 * TM * D * ob + TM * D * 4 + (2 << 20)
    vmem_limit = int(min(max(2 * vmem_est, 32 << 20), 64 << 20))

    compiler_params = pltpu.CompilerParams(
        dimension_semantics=("parallel", "arbitrary", "arbitrary"),
        vmem_limit_bytes=vmem_limit)

    base_bytes = (x2.nbytes + w1c.nbytes + w2c.nbytes + b1r.nbytes
                  + b2r.nbytes + T * D * ob)
    cost = pl.CostEstimate(
        flops=4 * T * E * D * F,
        transcendentals=T * E * F,
        bytes_accessed=base_bytes + (2 * T * E * cd.itemsize if gated
                                     else T * 4))

    out_shape = jax.ShapeDtypeStruct((T, D), x.dtype)
    out_spec = pl.BlockSpec((TM, D), lambda t, e, f: (t, 0))
    scratch = [pltpu.VMEM((TM, D), jnp.float32)]

    w1_spec = pl.BlockSpec((pl.Squeezed(), D, TF), lambda t, e, f: (e, 0, f))
    b1_spec = pl.BlockSpec((pl.Squeezed(), 1, TF), lambda t, e, f: (e, 0, f))
    w2_spec = pl.BlockSpec((pl.Squeezed(), TF, D), lambda t, e, f: (e, f, 0))
    b2_spec = pl.BlockSpec((1, D), lambda t, e, f: (0, 0))
    x_spec = pl.BlockSpec((TM, D), lambda t, e, f: (t, 0))

    if not gated:
        # Dense fast path: no dispatch/combine streams, no x*d multiply, no
        # in-kernel cross-lane reduction.  bias1 gate precomputed once on host
        # (exactly reproduces `expert_inputs.sum(-1).bool()` with ones mask).
        nz = (jnp.sum(xflat.astype(jnp.float32), axis=-1, keepdims=True)
              != 0.0).astype(jnp.float32)                    # (T, 1)
        kernel = functools.partial(_moe_dense_kernel, activation=activation)
        out = pl.pallas_call(
            kernel,
            out_shape=out_shape,
            grid_spec=pltpu.PrefetchScalarGridSpec(
                num_scalar_prefetch=0,
                grid=grid,
                in_specs=[
                    x_spec,
                    pl.BlockSpec((TM, 1), lambda t, e, f: (t, 0)),
                    w1_spec, b1_spec, w2_spec, b2_spec,
                ],
                out_specs=out_spec,
                scratch_shapes=scratch),
            compiler_params=compiler_params,
            cost_estimate=cost,
        )(x2, nz, w1c, b1r, w2c, b2r)
    else:
        if dispatch is None:
            dispatch = jnp.ones((B, N, E), dtype=x.dtype)
        if combine is None:
            combine = jnp.ones((B, N, E), dtype=x.dtype)
        # Expert-major (E, T, 1): each (t, e) grid step gets its own column.
        # (Transpose only paid on the non-default gated path.)
        disp = dispatch.reshape(T, E).T.reshape(E, T, 1).astype(cd)
        comb = combine.reshape(T, E).T.reshape(E, T, 1).astype(cd)
        dc_spec = pl.BlockSpec((pl.Squeezed(), TM, 1),
                               lambda t, e, f: (e, t, 0))
        kernel = functools.partial(_moe_gated_kernel,
                                   combine_method=combine_method,
                                   activation=activation)
        out = pl.pallas_call(
            kernel,
            out_shape=out_shape,
            grid_spec=pltpu.PrefetchScalarGridSpec(
                num_scalar_prefetch=0,
                grid=grid,
                in_specs=[
                    x_spec, dc_spec, dc_spec,
                    w1_spec, b1_spec, w2_spec, b2_spec,
                ],
                out_specs=out_spec,
                scratch_shapes=scratch),
            compiler_params=compiler_params,
            cost_estimate=cost,
        )(x2, disp, comb, w1c, b1r, w2c, b2r)

    return out.reshape(B, N, D)


# ---------------------------------------------------------------------------
# Pure-JAX reference (mirrors the kernel's bf16 casts so the match is tight)
# ---------------------------------------------------------------------------
def moe_layer_reference(x, w1, b1, w2, b2, dispatch=None, combine=None,
                        combine_method="sum", compute_dtype=jnp.bfloat16,
                        activation=None):
    if activation is None:
        activation = functools.partial(jax.nn.gelu, approximate=True)
    B, N, D = x.shape
    E, _, F = w1.shape
    T = B * N
    xf = x.reshape(T, D).astype(jnp.float32)
    xc = xf.astype(compute_dtype)
    out = jnp.zeros((T, D), jnp.float32)
    for e in range(E):
        if dispatch is None:
            xin = xc
            nz = (jnp.sum(xf, -1, keepdims=True) != 0.0).astype(jnp.float32)
        else:
            de = dispatch.reshape(T, E)[:, e:e + 1].astype(compute_dtype)
            xin = xc * de
            nz = (jnp.sum(xin.astype(jnp.float32), -1, keepdims=True)
                  != 0.0).astype(jnp.float32)
        h = jnp.dot(xin, w1[e].astype(compute_dtype),
                    preferred_element_type=jnp.float32)
        h = h + nz * b1[e].astype(jnp.float32)
        h = activation(h)
        o = jnp.dot(h.astype(compute_dtype), w2[e].astype(compute_dtype),
                    preferred_element_type=jnp.float32)
        if combine_method == "weighted_sum":
            ce = combine.reshape(T, E)[:, e:e + 1].astype(compute_dtype)
            o = o * ce.astype(jnp.float32)
        out = out + o
    out = out + b2.astype(jnp.float32)
    return out.reshape(B, N, D).astype(x.dtype)


# ---------------------------------------------------------------------------
# Demo / self-test
# ---------------------------------------------------------------------------
if __name__ == "__main__":
    B, N = 2, 192               # T = 384 tokens -> 3 token tiles of 128
    D, E, F = 128, 4, 256       # hidden_size, num_experts, expert_size

    key = jax.random.PRNGKey(0)
    kx, k1, k2, k3, k4, k5, k6 = jax.random.split(key, 7)

    x = jax.random.normal(kx, (B, N, D), dtype=jnp.float32)
    w1 = jax.random.normal(k1, (E, D, F), dtype=jnp.float32) * 0.05
    b1 = jax.random.normal(k2, (E, F), dtype=jnp.float32) * 0.05
    w2 = jax.random.normal(k3, (E, F, D), dtype=jnp.float32) * 0.05
    b2 = jax.random.normal(k4, (D,), dtype=jnp.float32) * 0.05

    # 1) Module default: gating disabled -> dense fast path, combine='sum'.
    out = moe_layer_forward(x, w1, b1, w2, b2, combine_method="sum",
                            tm=128, tf=128)
    out = jax.block_until_ready(out)
    ref = moe_layer_reference(x, w1, b1, w2, b2, None, None, "sum")
    assert out.shape == (B, N, D)
    err = float(jnp.max(jnp.abs(out - ref)))
    assert jnp.allclose(out, ref, atol=3e-3, rtol=3e-3), \
        f"dense path mismatch, max abs err {err}"

    # 2) Gated path: binary dispatch mask + weighted_sum combine.
    dispatch = (jax.random.uniform(k5, (B, N, E)) > 0.5).astype(jnp.float32)
    combine = jax.random.uniform(k6, (B, N, E), dtype=jnp.float32)
    out2 = moe_layer_forward(x, w1, b1, w2, b2, dispatch, combine,
                             combine_method="weighted_sum", tm=128, tf=128)
    out2 = jax.block_until_ready(out2)
    ref2 = moe_layer_reference(x, w1, b1, w2, b2, dispatch, combine,
                               "weighted_sum")
    err2 = float(jnp.max(jnp.abs(out2 - ref2)))
    assert jnp.allclose(out2, ref2, atol=3e-3, rtol=3e-3), \
        f"gated path mismatch, max abs err {err2}"

    print("KERNEL_OK")
</pallas_src>

<mosaic_0001>
module attributes {stable_mosaic.version = 11 : i64} {
  func.func @_moe_dense_kernel(%arg0: i32, %arg1: i32, %arg2: i32, %arg3: memref<128x128xbf16, #tpu.memory_space<vmem>>, %arg4: memref<128x1xf32, #tpu.memory_space<vmem>>, %arg5: memref<1x128x128xbf16, #tpu.memory_space<vmem>>, %arg6: memref<1x1x128xf32, #tpu.memory_space<vmem>>, %arg7: memref<1x128x128xbf16, #tpu.memory_space<vmem>>, %arg8: memref<1x128xf32, #tpu.memory_space<vmem>>, %arg9: memref<128x128xf32, #tpu.memory_space<vmem>>, %arg10: memref<128x128xf32, #tpu.memory_space<vmem>>) attributes {dimension_semantics = [#tpu.dimension_semantics<parallel>, #tpu.dimension_semantics<arbitrary>, #tpu.dimension_semantics<arbitrary>], iteration_bounds = array<i64: 3, 4, 2>, scalar_prefetch = 0 : i64, scratch_operands = 1 : i64, tpu.core_type = #tpu.core_type<tc>, window_params = [{transform_indices = @transform_0, window_bounds = array<i64: 128, 128>}, {transform_indices = @transform_1, window_bounds = array<i64: 128, 1>}, {transform_indices = @transform_2, window_bounds = array<i64: 1, 128, 128>}, {transform_indices = @transform_3, window_bounds = array<i64: 1, 1, 128>}, {transform_indices = @transform_4, window_bounds = array<i64: 1, 128, 128>}, {pipeline_mode = #tpu.pipeline_mode<synchronous>, transform_indices = @transform_5, window_bounds = array<i64: 1, 128>}, {transform_indices = @transform_6, window_bounds = array<i64: 128, 128>}]} {
    %c0_i32 = arith.constant 0 : i32
    %0 = arith.cmpi eq, %arg1, %c0_i32 : i32
    %c0_i32_0 = arith.constant 0 : i32
    %1 = arith.cmpi eq, %arg2, %c0_i32_0 : i32
    %2 = arith.andi %0, %1 : i1
    %3 = arith.extui %2 : i1 to i32
    %c0_i32_1 = arith.constant 0 : i32
    %4 = arith.cmpi ne, %3, %c0_i32_1 : i32
    scf.if %4 {
      %cst_24 = arith.constant 0.000000e+00 : f32
      %41 = vector.broadcast %cst_24 : f32 to vector<128x128xf32>
      %c0_25 = arith.constant 0 : index
      %c0_26 = arith.constant 0 : index
      %42 = vector.load %arg10[%c0_25, %c0_26] : memref<128x128xf32, #tpu.memory_space<vmem>>, vector<128x128xf32>
      tpu.vector_store %arg10[%c0_25, %c0_26], %41 {strides = array<i32>} : memref<128x128xf32, #tpu.memory_space<vmem>>, vector<128x128xf32>,
    } else {
    }
    %c0 = arith.constant 0 : index
    %c0_2 = arith.constant 0 : index
    %5 = vector.load %arg3[%c0, %c0_2] : memref<128x128xbf16, #tpu.memory_space<vmem>>, vector<128x128xbf16>
    %c0_3 = arith.constant 0 : index
    %c0_4 = arith.constant 0 : index
    %c0_5 = arith.constant 0 : index
    %6 = vector.load %arg5[%c0_3, %c0_4, %c0_5] : memref<1x128x128xbf16, #tpu.memory_space<vmem>>, vector<1x128x128xbf16>
    %7 = vector.shape_cast %6 : vector<1x128x128xbf16> to vector<128x128xbf16>
    %cst = arith.constant dense<0.000000e+00> : vector<128x128xf32>
    %8 = tpu.matmul %5, %7, %cst {dimension_numbers = #tpu.dot_dimension_numbers<[1], [0], [0], [1], [0, 0, 1, 1], [], []>} : vector<128x128xbf16>, vector<128x128xbf16>, vector<128x128xf32> -> vector<128x128xf32>
    %c0_6 = arith.constant 0 : index
    %c0_7 = arith.constant 0 : index
    %9 = vector.load %arg4[%c0_6, %c0_7] : memref<128x1xf32, #tpu.memory_space<vmem>>, vector<128x1xf32>
    %c0_8 = arith.constant 0 : index
    %c0_9 = arith.constant 0 : index
    %c0_10 = arith.constant 0 : index
    %10 = vector.load %arg6[%c0_8, %c0_9, %c0_10] : memref<1x1x128xf32, #tpu.memory_space<vmem>>, vector<1x1x128xf32>
    %11 = vector.shape_cast %10 : vector<1x1x128xf32> to vector<1x128xf32>
    %12 = vector.broadcast %9 : vector<128x1xf32> to vector<128x128xf32>
    %13 = vector.broadcast %11 : vector<1x128xf32> to vector<128x128xf32>
    %14 = arith.mulf %12, %13 : vector<128x128xf32>
    %15 = arith.addf %8, %14 : vector<128x128xf32>
    %16 = arith.mulf %15, %15 : vector<128x128xf32>
    %17 = arith.mulf %15, %16 : vector<128x128xf32>
    %cst_11 = arith.constant 4.471500e-02 : f32
    %18 = vector.broadcast %cst_11 : f32 to vector<128x128xf32>
    %19 = arith.mulf %18, %17 : vector<128x128xf32>
    %20 = arith.addf %15, %19 : vector<128x128xf32>
    %cst_12 = arith.constant 0.797884583 : f32
    %21 = vector.broadcast %cst_12 : f32 to vector<128x128xf32>
    %22 = arith.mulf %21, %20 : vector<128x128xf32>
    %23 = math.tanh %22 : vector<128x128xf32>
    %cst_13 = arith.constant 1.000000e+00 : f32
    %24 = vector.broadcast %cst_13 : f32 to vector<128x128xf32>
    %25 = arith.addf %24, %23 : vector<128x128xf32>
    %cst_14 = arith.constant 5.000000e-01 : f32
    %26 = vector.broadcast %cst_14 : f32 to vector<128x128xf32>
    %27 = arith.mulf %26, %25 : vector<128x128xf32>
    %28 = arith.mulf %15, %27 : vector<128x128xf32>
    %c0_15 = arith.constant 0 : index
    %c0_16 = arith.constant 0 : index
    %29 = vector.load %arg10[%c0_15, %c0_16] : memref<128x128xf32, #tpu.memory_space<vmem>>, vector<128x128xf32>
    %30 = arith.truncf %28 : vector<128x128xf32> to vector<128x128xbf16>
    %c0_17 = arith.constant 0 : index
    %c0_18 = arith.constant 0 : index
    %c0_19 = arith.constant 0 : index
    %31 = vector.load %arg7[%c0_17, %c0_18, %c0_19] : memref<1x128x128xbf16, #tpu.memory_space<vmem>>, vector<1x128x128xbf16>
    %32 = vector.shape_cast %31 : vector<1x128x128xbf16> to vector<128x128xbf16>
    %cst_20 = arith.constant dense<0.000000e+00> : vector<128x128xf32>
    %33 = tpu.matmul %30, %32, %cst_20 {dimension_numbers = #tpu.dot_dimension_numbers<[1], [0], [0], [1], [0, 0, 1, 1], [], []>} : vector<128x128xbf16>, vector<128x128xbf16>, vector<128x128xf32> -> vector<128x128xf32>
    %34 = arith.addf %29, %33 : vector<128x128xf32>
    %c0_21 = arith.constant 0 : index
    %c0_22 = arith.constant 0 : index
    %35 = vector.load %arg10[%c0_21, %c0_22] : memref<128x128xf32, #tpu.memory_space<vmem>>, vector<128x128xf32>
    tpu.vector_store %arg10[%c0_21, %c0_22], %34 {strides = array<i32>} : memref<128x128xf32, #tpu.memory_space<vmem>>, vector<128x128xf32>,
    %c3_i32 = arith.constant 3 : i32
    %36 = arith.cmpi eq, %arg1, %c3_i32 : i32
    %c1_i32 = arith.constant 1 : i32
    %37 = arith.cmpi eq, %arg2, %c1_i32 : i32
    %38 = arith.andi %36, %37 : i1
    %39 = arith.extui %38 : i1 to i32
    %c0_i32_23 = arith.constant 0 : i32
    %40 = arith.cmpi ne, %39, %c0_i32_23 : i32
    scf.if %40 {
      %c0_24 = arith.constant 0 : index
      %c0_25 = arith.constant 0 : index
      %41 = vector.load %arg10[%c0_24, %c0_25] : memref<128x128xf32, #tpu.memory_space<vmem>>, vector<128x128xf32>
      %c0_26 = arith.constant 0 : index
      %c0_27 = arith.constant 0 : index
      %42 = vector.load %arg8[%c0_26, %c0_27] : memref<1x128xf32, #tpu.memory_space<vmem>>, vector<1x128xf32>
      %43 = vector.broadcast %42 : vector<1x128xf32> to vector<128x128xf32>
      %44 = arith.addf %41, %43 : vector<128x128xf32>
      %c0_28 = arith.constant 0 : index
      %c0_29 = arith.constant 0 : index
      %45 = vector.load %arg9[%c0_28, %c0_29] : memref<128x128xf32, #tpu.memory_space<vmem>>, vector<128x128xf32>
      tpu.vector_store %arg9[%c0_28, %c0_29], %44 {strides = array<i32>} : memref<128x128xf32, #tpu.memory_space<vmem>>, vector<128x128xf32>,
    } else {
    }
    return
  }
  func.func @transform_0(%arg0: i32, %arg1: i32, %arg2: i32) -> (i32, i32) {
    %c0_i32 = arith.constant 0 : i32
    %c0_i32_0 = arith.constant 0 : i32
    return %arg0, %c0_i32 : i32, i32
  }
  func.func @transform_1(%arg0: i32, %arg1: i32, %arg2: i32) -> (i32, i32) {
    %c0_i32 = arith.constant 0 : i32
    %c0_i32_0 = arith.constant 0 : i32
    return %arg0, %c0_i32 : i32, i32
  }
  func.func @transform_2(%arg0: i32, %arg1: i32, %arg2: i32) -> (i32, i32, i32) {
    %c0_i32 = arith.constant 0 : i32
    %c0_i32_0 = arith.constant 0 : i32
    return %arg1, %c0_i32, %arg2 : i32, i32, i32
  }
  func.func @transform_3(%arg0: i32, %arg1: i32, %arg2: i32) -> (i32, i32, i32) {
    %c0_i32 = arith.constant 0 : i32
    %c0_i32_0 = arith.constant 0 : i32
    return %arg1, %c0_i32, %arg2 : i32, i32, i32
  }
  func.func @transform_4(%arg0: i32, %arg1: i32, %arg2: i32) -> (i32, i32, i32) {
    %c0_i32 = arith.constant 0 : i32
    %c0_i32_0 = arith.constant 0 : i32
    return %arg1, %arg2, %c0_i32 : i32, i32, i32
  }
  func.func @transform_5(%arg0: i32, %arg1: i32, %arg2: i32) -> (i32, i32) {
    %c0_i32 = arith.constant 0 : i32
    %c0_i32_0 = arith.constant 0 : i32
    %c0_i32_1 = arith.constant 0 : i32
    return %c0_i32, %c0_i32_0 : i32, i32
  }
  func.func @transform_6(%arg0: i32, %arg1: i32, %arg2: i32) -> (i32, i32) {
    %c0_i32 = arith.constant 0 : i32
    %c0_i32_0 = arith.constant 0 : i32
    return %arg0, %c0_i32 : i32, i32
  }
}

</mosaic_0001>

<llo_original>
// kernel: tpu_custom_call.1
$region0: #{tpu_custom_call.1}
  #allocation0 [shape = 'u32[]', space=smem, size = 0x4, offset = 0x4, fixed_abs, tag = 'smem constant byte address 0x4 - core index']
  #allocation1 [shape = 'u32[144,128]{1,0:T(1,128)}', space=vmem, size = 0x12000, scoped, tag = 'internal scratch']
  #allocation2 [shape = 'f32[128,128]{1,0:T(8,128)}', space=vmem, size = 0x10000, scoped, tag = 'scratch operand']
  %s0 = inlined_call_operand.vmem [shape: bf16[384,128], index: 0, kind: input, shape index: {}]
  %s1 = inlined_call_operand.vmem [shape: f32[384,1], index: 1, kind: input, shape index: {}]
  %s2 = inlined_call_operand.hbm [shape: bf16[4,128,256], index: 2, kind: input, shape index: {}]
  %s3 = inlined_call_operand.vmem [shape: f32[4,1,256], index: 3, kind: input, shape index: {}]
  %s4 = inlined_call_operand.hbm [shape: bf16[4,256,128], index: 4, kind: input, shape index: {}]
  %s5 = inlined_call_operand.vmem [shape: f32[1,128], index: 5, kind: input, shape index: {}]
  %s6 = inlined_call_operand.hbm [shape: f32[384,128], index: 6, kind: output, shape index: {}]
  %s7 = sld [smem:[#allocation0]]
  $region73: #{tpu_custom_call.1} parent=0
    _
  %s9 = ssub.s32 1, %s7
  %s10 = scalar_select 0, %s9, %s7
  $region1: #{tpu_custom_call.1} parent=0
    #allocation3 [shape = 'u8[65536]{0}', space=vmem, size = 0x10000, scoped, tag = 'input window, operand 2']
    #allocation4 [shape = 's32[2]{0}', space=sflag, size = 0x8, scoped, tag = 'scoped memory for tpu_custom_call.1']
    #allocation5 [shape = 's32[2]{0}', space=sflag, size = 0x8, scoped, tag = 'scoped memory for tpu_custom_call.1']
    #allocation6 [shape = 'u8[65536]{0}', space=vmem, size = 0x10000, scoped, tag = 'input window, operand 4']
    #allocation7 [shape = 's32[2]{0}', space=sflag, size = 0x8, scoped, tag = 'scoped memory for tpu_custom_call.1']
    #allocation8 [shape = 'u8[131072]{0}', space=vmem, size = 0x20000, scoped, tag = 'output window, operand 0']
    %11 = vsyncpa [#allocation4], 0
    %s12 = scalar_lea.sflag [#allocation4], 1
    %13 = vsyncpa %s12, 0
    %14 = vsyncpa [#allocation7], 0
    %s15 = scalar_lea.sflag [#allocation7], 1
    %16 = vsyncpa %s15, 0
    %17 = vsyncpa [#allocation5], 0
    %s18 = scalar_lea.sflag [#allocation5], 1
    %19 = vsyncpa %s18, 0
    loop: start=0, step=1, limit=26
    $region2: #{tpu_custom_call.1} parent=1 // loop_pre_header
      _
    $region3: #{tpu_custom_call.1} parent=1 // loop_header
      %s21 = sphi 0, %s25
      %p22 = scmp.ge.s32.totalorder %s21, 26
      %s28 = sphi 0, %s47
      %s29 = sphi 0, %s43
      %s30 = sphi 0, %s39
      %s31 = sphi 0, %s28
      %s32 = sphi 0, %s29
      %s33 = sphi 0, %s30
      %s34 = sphi 0, %s31
      %s35 = sphi 0, %s32
      %s36 = sphi 0, %s33
      %s50 = sphi 0, %s52
      %s53 = sphi 0, %s50
      %s54 = sphi 0, %s53
      %s70 = sphi 0, %s54
      %s76 = sphi 0, %s78
      %s79 = sphi 0, %s76
      %s80 = sphi 0, %s79
      %s96 = sphi 0, %s80
      %s104 = sphi 0, %s106
      %s107 = sphi 0, %s104
      %s108 = sphi 0, %s107
      %s124 = sphi 0, %s108
      %s132 = sphi 0, %s134
      %s135 = sphi 0, %s132
      %s136 = sphi 0, %s135
      %s152 = sphi 0, %s136
      %s160 = sphi 0, %s162
      %s163 = sphi 0, %s160
      %s164 = sphi 0, %s163
      %s180 = sphi 0, %s164
      %s184 = sphi 0, %s184
      %s186 = sphi 0, %s184
      %s187 = sphi 0, %s186
      %s201 = sphi 0, %s187
      %s207 = sphi 0, %s209
      %s210 = sphi 0, %s207
      %s211 = sphi 0, %s210
      %s227 = sphi 0, %s211
    $region4: #{tpu_custom_call.1} parent=1 // loop_header_branch
      %24 = sbr.rel (%p22) target = $region8
    $region5: #{tpu_custom_call.1} parent=1 // loop_body
      %s26 = ssub.s32 %s21, 1
      %s27 = ssub.s32 %s21, 2
      %s37 = sadd.s32 1, %s30
      %p38 = scmp.ge.s32.totalorder %s37, 2
      %s39 = scalar_select %p38, 0, %s37
      %s40 = sadd.s32 1, %s29
      %s41 = scalar_select %p38, %s40, %s29
      %p42 = scmp.ge.s32.totalorder %s41, 4
      %s43 = scalar_select %p42, 0, %s41
      %s44 = sadd.s32 1, %s28
      %s45 = scalar_select %p42, %s44, %s28
      %p46 = scmp.ge.s32.totalorder %s45, 3
      %s47 = scalar_select %p46, 0, %s45
      %s48 = ssub.s32 %s28, %s47
      %p49 = scmp.eq.s32.totalorder %s48, 0
      %s51 = sadd.s32 %s50, 1
      %s52 = scalar_select %p49, %s50, %s51
      %p55 = pneg %p49
      %p56 = scmp.eq.s32.totalorder %s21, 23
      %p57 = por %p55, %p56
      %p58 = scmp.ne.s32.totalorder %s50, %s53
      %p59 = scmp.eq.s32.totalorder %s21, 0
      %p60 = por %p58, %p59
      %p61 = scmp.ne.s32.totalorder %s50, %s53
      %p62 = scmp.eq.s32.totalorder %s26, 23
      %p63 = por %p61, %p62
      %p64 = scmp.ne.s32.totalorder %s53, %s54
      %p65 = scmp.eq.s32.totalorder %s26, 0
      %p66 = por %p64, %p65
      %p67 = scmp.ne.s32.totalorder %s53, %s54
      %p68 = scmp.eq.s32.totalorder %s27, 23
      %p69 = por %p67, %p68
      %p71 = scmp.ne.s32.totalorder %s54, %s70
      %p72 = scmp.eq.s32.totalorder %s27, 0
      %p73 = por %p71, %p72
      %s74 = ssub.s32 %s28, %s47
      %p75 = scmp.eq.s32.totalorder %s74, 0
      %s77 = sadd.s32 %s76, 1
      %s78 = scalar_select %p75, %s76, %s77
      %p81 = pneg %p75
      %p82 = scmp.eq.s32.totalorder %s21, 23
      %p83 = por %p81, %p82
      %p84 = scmp.ne.s32.totalorder %s76, %s79
      %p85 = scmp.eq.s32.totalorder %s21, 0
      %p86 = por %p84, %p85
      %p87 = scmp.ne.s32.totalorder %s76, %s79
      %p88 = scmp.eq.s32.totalorder %s26, 23
      %p89 = por %p87, %p88
      %p90 = scmp.ne.s32.totalorder %s79, %s80
      %p91 = scmp.eq.s32.totalorder %s26, 0
      %p92 = por %p90, %p91
      %p93 = scmp.ne.s32.totalorder %s79, %s80
      %p94 = scmp.eq.s32.totalorder %s27, 23
      %p95 = por %p93, %p94
      %p97 = scmp.ne.s32.totalorder %s80, %s96
      %p98 = scmp.eq.s32.totalorder %s27, 0
      %p99 = por %p97, %p98
      %s100 = ssub.s32 %s29, %s43
      %s101 = ssub.s32 %s30, %s39
      %s102 = sor.u32 %s100, %s101
      %p103 = scmp.eq.s32.totalorder %s102, 0
      %s105 = sadd.s32 %s104, 1
      %s106 = scalar_select %p103, %s104, %s105
      %p109 = pneg %p103
      %p110 = scmp.eq.s32.totalorder %s21, 23
      %p111 = por %p109, %p110
      %p112 = scmp.ne.s32.totalorder %s104, %s107
      %p113 = scmp.eq.s32.totalorder %s21, 0
      %p114 = por %p112, %p113
      %p115 = scmp.ne.s32.totalorder %s104, %s107
      %p116 = scmp.eq.s32.totalorder %s26, 23
      %p117 = por %p115, %p116
      %p118 = scmp.ne.s32.totalorder %s107, %s108
      %p119 = scmp.eq.s32.totalorder %s26, 0
      %p120 = por %p118, %p119
      %p121 = scmp.ne.s32.totalorder %s107, %s108
      %p122 = scmp.eq.s32.totalorder %s27, 23
      %p123 = por %p121, %p122
      %p125 = scmp.ne.s32.totalorder %s108, %s124
      %p126 = scmp.eq.s32.totalorder %s27, 0
      %p127 = por %p125, %p126
      %s128 = ssub.s32 %s29, %s43
      %s129 = ssub.s32 %s30, %s39
      %s130 = sor.u32 %s128, %s129
      %p131 = scmp.eq.s32.totalorder %s130, 0
      %s133 = sadd.s32 %s132, 1
      %s134 = scalar_select %p131, %s132, %s133
      %p137 = pneg %p131
      %p138 = scmp.eq.s32.totalorder %s21, 23
      %p139 = por %p137, %p138
      %p140 = scmp.ne.s32.totalorder %s132, %s135
      %p141 = scmp.eq.s32.totalorder %s21, 0
      %p142 = por %p140, %p141
      %p143 = scmp.ne.s32.totalorder %s132, %s135
      %p144 = scmp.eq.s32.totalorder %s26, 23
      %p145 = por %p143, %p144
      %p146 = scmp.ne.s32.totalorder %s135, %s136
      %p147 = scmp.eq.s32.totalorder %s26, 0
      %p148 = por %p146, %p147
      %p149 = scmp.ne.s32.totalorder %s135, %s136
      %p150 = scmp.eq.s32.totalorder %s27, 23
      %p151 = por %p149, %p150
      %p153 = scmp.ne.s32.totalorder %s136, %s152
      %p154 = scmp.eq.s32.totalorder %s27, 0
      %p155 = por %p153, %p154
      %s156 = ssub.s32 %s29, %s43
      %s157 = ssub.s32 %s30, %s39
      %s158 = sor.u32 %s156, %s157
      %p159 = scmp.eq.s32.totalorder %s158, 0
      %s161 = sadd.s32 %s160, 1
      %s162 = scalar_select %p159, %s160, %s161
      %p165 = pneg %p159
      %p166 = scmp.eq.s32.totalorder %s21, 23
      %p167 = por %p165, %p166
      %p168 = scmp.ne.s32.totalorder %s160, %s163
      %p169 = scmp.eq.s32.totalorder %s21, 0
      %p170 = por %p168, %p169
      %p171 = scmp.ne.s32.totalorder %s160, %s163
      %p172 = scmp.eq.s32.totalorder %s26, 23
      %p173 = por %p171, %p172
      %p174 = scmp.ne.s32.totalorder %s163, %s164
      %p175 = scmp.eq.s32.totalorder %s26, 0
      %p176 = por %p174, %p175
      %p177 = scmp.ne.s32.totalorder %s163, %s164
      %p178 = scmp.eq.s32.totalorder %s27, 23
      %p179 = por %p177, %p178
      %p181 = scmp.ne.s32.totalorder %s164, %s180
      %p182 = scmp.eq.s32.totalorder %s27, 0
      %p183 = por %p181, %p182
      %s185 = sadd.s32 %s184, 1
      %p188 = scmp.eq.s32.totalorder %s21, 23
      %p189 = scmp.ne.s32.totalorder %s184, %s186
      %p190 = scmp.eq.s32.totalorder %s21, 0
      %p191 = por %p189, %p190
      %p192 = scmp.ne.s32.totalorder %s184, %s186
      %p193 = scmp.eq.s32.totalorder %s26, 23
      %p194 = por %p192, %p193
      %p195 = scmp.ne.s32.totalorder %s186, %s187
      %p196 = scmp.eq.s32.totalorder %s26, 0
      %p197 = por %p195, %p196
      %p198 = scmp.ne.s32.totalorder %s186, %s187
      %p199 = scmp.eq.s32.totalorder %s27, 23
      %p200 = por %p198, %p199
      %p202 = scmp.ne.s32.totalorder %s187, %s201
      %p203 = scmp.eq.s32.totalorder %s27, 0
      %p204 = por %p202, %p203
      %s205 = ssub.s32 %s28, %s47
      %p206 = scmp.eq.s32.totalorder %s205, 0
      %s208 = sadd.s32 %s207, 1
      %s209 = scalar_select %p206, %s207, %s208
      %p212 = pneg %p206
      %p213 = scmp.eq.s32.totalorder %s21, 23
      %p214 = por %p212, %p213
      %p215 = scmp.ne.s32.totalorder %s207, %s210
      %p216 = scmp.eq.s32.totalorder %s21, 0
      %p217 = por %p215, %p216
      %p218 = scmp.ne.s32.totalorder %s207, %s210
      %p219 = scmp.eq.s32.totalorder %s26, 23
      %p220 = por %p218, %p219
      %p221 = scmp.ne.s32.totalorder %s210, %s211
      %p222 = scmp.eq.s32.totalorder %s26, 0
      %p223 = por %p221, %p222
      %p224 = scmp.ne.s32.totalorder %s210, %s211
      %p225 = scmp.eq.s32.totalorder %s27, 23
      %p226 = por %p224, %p225
      %p228 = scmp.ne.s32.totalorder %s211, %s227
      %p229 = scmp.eq.s32.totalorder %s27, 0
      %p230 = por %p228, %p229
      %p231 = scmp.le.s32.totalorder 1, %s21
      %p232 = scmp.lt.s32.totalorder %s21, 25
      %p233 = pnand %p231, %p232
      %p234 = pneg %p233
      // Predicated region
      $region9: #{tpu_custom_call.1} parent=5 // pred_check
        _
      $region10: #{tpu_custom_call.1} parent=5 // pred_check_branch
        %236 = sbr.rel (%p233) target = $region12
      $region11: #{tpu_custom_call.1} parent=5 // pred_region
        %s237 = ssub.s32 %s21, 1
        // Predicated region
        $region13: #{tpu_custom_call.1} parent=11 // pred_check
          %p238 = pneg %p197
        $region14: #{tpu_custom_call.1} parent=11 // pred_check_branch
          %240 = sbr.rel (%p238) target = $region16
        $region15: #{tpu_custom_call.1} parent=11 // pred_region
          _
        $region16: #{tpu_custom_call.1} parent=11 // pred_fallthru
          _
      $region12: #{tpu_custom_call.1} parent=5 // pred_fallthru
        _
      %p241 = scmp.lt.s32.totalorder %s21, 24
      // Predicated region
      $region17: #{tpu_custom_call.1} parent=5 // pred_check
        %p242 = pneg %p241
      $region18: #{tpu_custom_call.1} parent=5 // pred_check_branch
        %244 = sbr.rel (%p242) target = $region20
      $region19: #{tpu_custom_call.1} parent=5 // pred_region
        // Predicated region
        $region21: #{tpu_custom_call.1} parent=19 // pred_check
          %p245 = pneg %p60
        $region22: #{tpu_custom_call.1} parent=19 // pred_check_branch
          %247 = sbr.rel (%p245) target = $region24
        $region23: #{tpu_custom_call.1} parent=19 // pred_region
          %s248 = smul.u32 16, %s28
          %p249 = scmp.lt.s32.totalorder %s248, 47
          %s250 = scalar_select %p249, %s248, 47
          %s251 = smul.addr %s250, 4
          %s252 = scalar_lea.vmem %s0, %s251
          %s253 = smul.u32 16, %s28
        $region24: #{tpu_custom_call.1} parent=19 // pred_fallthru
          _
        // Predicated region
        $region25: #{tpu_custom_call.1} parent=19 // pred_check
          %p254 = pneg %p86
        $region26: #{tpu_custom_call.1} parent=19 // pred_check_branch
          %256 = sbr.rel (%p254) target = $region28
        $region27: #{tpu_custom_call.1} parent=19 // pred_region
          %s257 = smul.u32 16, %s28
          %p258 = scmp.lt.s32.totalorder %s257, 47
          %s259 = scalar_select %p258, %s257, 47
          %s260 = smul.addr %s259, 8
          %s261 = scalar_lea.vmem %s1, %s260
          %s262 = smul.u32 16, %s28
        $region28: #{tpu_custom_call.1} parent=19 // pred_fallthru
          _
        // Predicated region
        $region29: #{tpu_custom_call.1} parent=19 // pred_check
          %p263 = pneg %p114
        $region30: #{tpu_custom_call.1} parent=19 // pred_check_branch
          %265 = sbr.rel (%p263) target = $region32
        $region31: #{tpu_custom_call.1} parent=19 // pred_region
          %s266 = sand.u32 %s104, 1
          %s267 = scalar_lea.sflag [#allocation4], %s266
          %s268 = sand.u32 %s104, 1
          %s269 = smul.addr %s268, 64
          %s270 = scalar_lea.vmem [#allocation3], %s269
          %s272 = ssub.s32 1024, 1024
          %273 = vsyncadd %s267, %s272
          %s274 = smul.addr %s29, 32
          %s275 = sadd.s32 %s30, %s274
          %s276 = smul.addr %s275, 64
          %s277 = scalar_lea.hbm %s2, %s276
          %s278 = sshll.u32 %s270, 4
          %s279 = int_to_ptr.vmem [resolvable:$true] %s278
          %284 = dma.hbm_to_vmem [thread:$0]  %s277, 1024, %s279, %s267, 128, 64, 4
        $region32: #{tpu_custom_call.1} parent=19 // pred_fallthru
          _
        // Predicated region
        $region33: #{tpu_custom_call.1} parent=19 // pred_check
          %p285 = pneg %p142
        $region34: #{tpu_custom_call.1} parent=19 // pred_check_branch
          %287 = sbr.rel (%p285) target = $region36
        $region35: #{tpu_custom_call.1} parent=19 // pred_region
          %p288 = scmp.lt.s32.totalorder %s29, 3
          %s289 = scalar_select %p288, %s29, 3
          %p290 = scmp.lt.s32.totalorder %s30, 1
          %s291 = scalar_select %p290, %s30, 1
          %s292 = smul.addr %s289, 2
          %s293 = sadd.s32 %s291, %s292
          %s294 = scalar_lea.vmem %s3, %s293
        $region36: #{tpu_custom_call.1} parent=19 // pred_fallthru
          _
        // Predicated region
        $region37: #{tpu_custom_call.1} parent=19 // pred_check
          %p295 = pneg %p170
        $region38: #{tpu_custom_call.1} parent=19 // pred_check_branch
          %297 = sbr.rel (%p295) target = $region40
        $region39: #{tpu_custom_call.1} parent=19 // pred_region
          %s298 = sand.u32 %s160, 1
          %s299 = scalar_lea.sflag [#allocation7], %s298
          %s300 = sand.u32 %s160, 1
          %s301 = smul.addr %s300, 64
          %s302 = scalar_lea.vmem [#allocation6], %s301
          %s303 = smul.u32 16, %s30
          %s305 = ssub.s32 1024, 1024
          %306 = vsyncadd %s299, %s305
          %s307 = smul.addr %s29, 32
          %s308 = sadd.s32 %s303, %s307
          %s309 = smul.addr %s308, 64
          %s310 = scalar_lea.hbm %s4, %s309
          %s311 = sshll.u32 %s302, 4
          %s312 = int_to_ptr.vmem [resolvable:$true] %s311
          %317 = dma.hbm_to_vmem [thread:$0]  %s310, 1024, %s312, %s299, 64, 64, 4
        $region40: #{tpu_custom_call.1} parent=19 // pred_fallthru
          _
      $region20: #{tpu_custom_call.1} parent=5 // pred_fallthru
        _
      %p318 = scmp.le.s32.totalorder 1, %s21
      %p319 = scmp.lt.s32.totalorder %s21, 25
      %p320 = pnand %p318, %p319
      %p321 = pneg %p320
      // Predicated region
      $region41: #{tpu_custom_call.1} parent=5 // pred_check
        _
      $region42: #{tpu_custom_call.1} parent=5 // pred_check_branch
        %323 = sbr.rel (%p320) target = $region44
      $region43: #{tpu_custom_call.1} parent=5 // pred_region
        %s324 = ssub.s32 %s21, 1
        %s325 = sand.u32 %s107, 1
        %s326 = scalar_lea.sflag [#allocation4], %s325
        %s327 = sand.u32 %s107, 1
        %s328 = smul.addr %s327, 64
        %s329 = scalar_lea.vmem [#allocation3], %s328
        // Predicated region
        $region45: #{tpu_custom_call.1} parent=43 // pred_check
          %p330 = pneg %p120
        $region46: #{tpu_custom_call.1} parent=43 // pred_check_branch
          %332 = sbr.rel (%p330) target = $region48
        $region47: #{tpu_custom_call.1} parent=43 // pred_region
          %333 = dma.done %s326, 1024
        $region48: #{tpu_custom_call.1} parent=43 // pred_fallthru
          _
        %s334 = sand.u32 %s163, 1
        %s335 = scalar_lea.sflag [#allocation7], %s334
        %s336 = sand.u32 %s163, 1
        %s337 = smul.addr %s336, 64
        %s338 = scalar_lea.vmem [#allocation6], %s337
        // Predicated region
        $region49: #{tpu_custom_call.1} parent=43 // pred_check
          %p339 = pneg %p176
        $region50: #{tpu_custom_call.1} parent=43 // pred_check_branch
          %341 = sbr.rel (%p339) target = $region52
        $region51: #{tpu_custom_call.1} parent=43 // pred_region
          %342 = dma.done %s335, 1024
        $region52: #{tpu_custom_call.1} parent=43 // pred_fallthru
          _
        %s343 = smul.u32 16, %s31
        %p344 = scmp.lt.s32.totalorder %s343, 47
        %s345 = scalar_select %p344, %s343, 47
        %s346 = smul.addr %s345, 4
        %s347 = scalar_lea.vmem %s0, %s346
        %p348 = pneg %p66
        %p349 = pneg %p63
        %s350 = smul.u32 16, %s31
        %p351 = scmp.lt.s32.totalorder %s350, 47
        %s352 = scalar_select %p351, %s350, 47
        %s353 = smul.addr %s352, 8
        %s354 = scalar_lea.vmem %s1, %s353
        %p355 = pneg %p92
        %p356 = pneg %p89
        %s357 = sand.u32 %s107, 1
        %s358 = scalar_lea.sflag [#allocation4], %s357
        %s359 = sand.u32 %s107, 1
        %s360 = smul.addr %s359, 64
        %s361 = scalar_lea.vmem [#allocation3], %s360
        %p362 = pneg %p120
        %p363 = pneg %p117
        %p364 = scmp.lt.s32.totalorder %s32, 3
        %s365 = scalar_select %p364, %s32, 3
        %p366 = scmp.lt.s32.totalorder %s33, 1
        %s367 = scalar_select %p366, %s33, 1
        %s368 = smul.addr %s365, 2
        %s369 = sadd.s32 %s367, %s368
        %s370 = scalar_lea.vmem %s3, %s369
        %p371 = pneg %p148
        %p372 = pneg %p145
        %s373 = sand.u32 %s163, 1
        %s374 = scalar_lea.sflag [#allocation7], %s373
        %s375 = sand.u32 %s163, 1
        %s376 = smul.addr %s375, 64
        %s377 = scalar_lea.vmem [#allocation6], %s376
        %p378 = pneg %p176
        %p379 = pneg %p173
        %p380 = pneg %p197
        %p381 = pneg %p194
        %p382 = pneg %p223
        %p383 = pneg %p220
        %s384 = sand.u32 %s210, 1
        %s385 = scalar_lea.sflag [#allocation5], %s384
        %s386 = sand.u32 %s210, 1
        %s387 = smul.addr %s386, 128
        %s388 = scalar_lea.vmem [#allocation8], %s387
        %s389 = smul.u32 16, %s31
        %p390 = scmp.lt.s32.totalorder %s389, 47
        %s391 = scalar_select %p390, %s389, 47
        %s392 = smul.addr %s391, 4
        %s393 = scalar_lea.vmem %s0, %s392
        %s394 = smul.u32 16, %s31
        %s395 = smul.u32 16, %s31
        %p396 = scmp.lt.s32.totalorder %s395, 47
        %s397 = scalar_select %p396, %s395, 47
        %s398 = smul.addr %s397, 8
        %s399 = scalar_lea.vmem %s1, %s398
        %s400 = smul.u32 16, %s31
        %p401 = scmp.lt.s32.totalorder %s32, 3
        %s402 = scalar_select %p401, %s32, 3
        %p403 = scmp.lt.s32.totalorder %s33, 1
        %s404 = scalar_select %p403, %s33, 1
        %s405 = smul.addr %s402, 2
        %s406 = sadd.s32 %s404, %s405
        %s407 = scalar_lea.vmem %s3, %s406
        %s408 = smul.u32 16, %s33
        %s409 = smul.u32 16, %s31
        %p411 = scmp.eq.s32.totalorder %s32, 0
        %p412 = scmp.eq.s32.totalorder %s33, 0
        %p413 = pnand %p411, %p412
        %p414 = pneg %p413
        // Predicated region
        $region53: #{tpu_custom_call.1} parent=43 // pred_check
          _
        $region54: #{tpu_custom_call.1} parent=43 // pred_check_branch
          %416 = sbr.rel (%p413) target = $region56
        $region55: #{tpu_custom_call.1} parent=43 // pred_region
          %417 = vst [vmem:[#allocation2] sm:$0xff] 0.0
          %418 = vst [vmem:[#allocation2 + $0x8] sm:$0xff] 0.0
          %419 = vst [vmem:[#allocation2 + $0x10] sm:$0xff] 0.0
          %420 = vst [vmem:[#allocation2 + $0x18] sm:$0xff] 0.0
          %421 = vst [vmem:[#allocation2 + $0x20] sm:$0xff] 0.0
          %422 = vst [vmem:[#allocation2 + $0x28] sm:$0xff] 0.0
          %423 = vst [vmem:[#allocation2 + $0x30] sm:$0xff] 0.0
          %424 = vst [vmem:[#allocation2 + $0x38] sm:$0xff] 0.0
          %425 = vst [vmem:[#allocation2 + $0x40] sm:$0xff] 0.0
          %426 = vst [vmem:[#allocation2 + $0x48] sm:$0xff] 0.0
          %427 = vst [vmem:[#allocation2 + $0x50] sm:$0xff] 0.0
          %428 = vst [vmem:[#allocation2 + $0x58] sm:$0xff] 0.0
          %429 = vst [vmem:[#allocation2 + $0x60] sm:$0xff] 0.0
          %430 = vst [vmem:[#allocation2 + $0x68] sm:$0xff] 0.0
          %431 = vst [vmem:[#allocation2 + $0x70] sm:$0xff] 0.0
          %432 = vst [vmem:[#allocation2 + $0x78] sm:$0xff] 0.0
        $region56: #{tpu_custom_call.1} parent=43 // pred_fallthru
          _
        %v433 = vld [vmem:[%s393] sm:$0xf]
        %v434 = vld [vmem:[%s393 + $0x4] sm:$0xf]
        %v435 = vld [vmem:[%s393 + $0x8] sm:$0xf]
        %v436 = vld [vmem:[%s393 + $0xc] sm:$0xf]
        %v437 = vld [vmem:[%s393 + $0x10] sm:$0xf]
        %v438 = vld [vmem:[%s393 + $0x14] sm:$0xf]
        %v439 = vld [vmem:[%s393 + $0x18] sm:$0xf]
        %v440 = vld [vmem:[%s393 + $0x1c] sm:$0xf]
        %v441 = vld [vmem:[%s393 + $0x20] sm:$0xf]
        %v442 = vld [vmem:[%s393 + $0x24] sm:$0xf]
        %v443 = vld [vmem:[%s393 + $0x28] sm:$0xf]
        %v444 = vld [vmem:[%s393 + $0x2c] sm:$0xf]
        %v445 = vld [vmem:[%s393 + $0x30] sm:$0xf]
        %v446 = vld [vmem:[%s393 + $0x34] sm:$0xf]
        %v447 = vld [vmem:[%s393 + $0x38] sm:$0xf]
        %v448 = vld [vmem:[%s393 + $0x3c] sm:$0xf]
        %v449 = vld [vmem:[%s329] sm:$0xf]
        %v450 = vld [vmem:[%s329 + $0x4] sm:$0xf]
        %v451 = vld [vmem:[%s329 + $0x8] sm:$0xf]
        %v452 = vld [vmem:[%s329 + $0xc] sm:$0xf]
        %v453 = vld [vmem:[%s329 + $0x10] sm:$0xf]
        %v454 = vld [vmem:[%s329 + $0x14] sm:$0xf]
        %v455 = vld [vmem:[%s329 + $0x18] sm:$0xf]
        %v456 = vld [vmem:[%s329 + $0x1c] sm:$0xf]
        %v457 = vld [vmem:[%s329 + $0x20] sm:$0xf]
        %v458 = vld [vmem:[%s329 + $0x24] sm:$0xf]
        %v459 = vld [vmem:[%s329 + $0x28] sm:$0xf]
        %v460 = vld [vmem:[%s329 + $0x2c] sm:$0xf]
        %v461 = vld [vmem:[%s329 + $0x30] sm:$0xf]
        %v462 = vld [vmem:[%s329 + $0x34] sm:$0xf]
        %v463 = vld [vmem:[%s329 + $0x38] sm:$0xf]
        %v464 = vld [vmem:[%s329 + $0x3c] sm:$0xf]
        %v465 = vld [vmem:[%s399] sm:$0xff]
        %v466 = vld [vmem:[%s399 + $0x8] sm:$0xff]
        %v467 = vld [vmem:[%s399 + $0x10] sm:$0xff]
        %v468 = vld [vmem:[%s399 + $0x18] sm:$0xff]
        %v469 = vld [vmem:[%s399 + $0x20] sm:$0xff]
        %v470 = vld [vmem:[%s399 + $0x28] sm:$0xff]
        %v471 = vld [vmem:[%s399 + $0x30] sm:$0xff]
        %v472 = vld [vmem:[%s399 + $0x38] sm:$0xff]
        %v473 = vld [vmem:[%s399 + $0x40] sm:$0xff]
        %v474 = vld [vmem:[%s399 + $0x48] sm:$0xff]
        %v475 = vld [vmem:[%s399 + $0x50] sm:$0xff]
        %v476 = vld [vmem:[%s399 + $0x58] sm:$0xff]
        %v477 = vld [vmem:[%s399 + $0x60] sm:$0xff]
        %v478 = vld [vmem:[%s399 + $0x68] sm:$0xff]
        %v479 = vld [vmem:[%s399 + $0x70] sm:$0xff]
        %v480 = vld [vmem:[%s399 + $0x78] sm:$0xff]
        %v481 = vld [vmem:[%s407] sm:$0x1]
        %483 = vset.pattern.permute.xlu0 0
        %484 = vperm.xlu0 %483, %v465
        %v485 = vpop.permute.xlu0 %484
        %488 = vset.pattern.permute.xlu0 0
        %489 = vperm.xlu0 %488, %v466
        %v490 = vpop.permute.xlu0 %489
        %493 = vset.pattern.permute.xlu0 0
        %494 = vperm.xlu0 %493, %v467
        %v495 = vpop.permute.xlu0 %494
        %498 = vset.pattern.permute.xlu0 0
        %499 = vperm.xlu0 %498, %v468
        %v500 = vpop.permute.xlu0 %499
        %503 = vset.pattern.permute.xlu0 0
        %504 = vperm.xlu0 %503, %v469
        %v505 = vpop.permute.xlu0 %504
        %508 = vset.pattern.permute.xlu0 0
        %509 = vperm.xlu0 %508, %v470
        %v510 = vpop.permute.xlu0 %509
        %513 = vset.pattern.permute.xlu0 0
        %514 = vperm.xlu0 %513, %v471
        %v515 = vpop.permute.xlu0 %514
        %518 = vset.pattern.permute.xlu0 0
        %519 = vperm.xlu0 %518, %v472
        %v520 = vpop.permute.xlu0 %519
        %523 = vset.pattern.permute.xlu0 0
        %524 = vperm.xlu0 %523, %v473
        %v525 = vpop.permute.xlu0 %524
        %528 = vset.pattern.permute.xlu0 0
        %529 = vperm.xlu0 %528, %v474
        %v530 = vpop.permute.xlu0 %529
        %533 = vset.pattern.permute.xlu0 0
        %534 = vperm.xlu0 %533, %v475
        %v535 = vpop.permute.xlu0 %534
        %538 = vset.pattern.permute.xlu0 0
        %539 = vperm.xlu0 %538, %v476
        %v540 = vpop.permute.xlu0 %539
        %543 = vset.pattern.permute.xlu0 0
        %544 = vperm.xlu0 %543, %v477
        %v545 = vpop.permute.xlu0 %544
        %548 = vset.pattern.permute.xlu0 0
        %549 = vperm.xlu0 %548, %v478
        %v550 = vpop.permute.xlu0 %549
        %553 = vset.pattern.permute.xlu0 0
        %554 = vperm.xlu0 %553, %v479
        %v555 = vpop.permute.xlu0 %554
        %558 = vset.pattern.permute.xlu0 0
        %559 = vperm.xlu0 %558, %v480
        %v560 = vpop.permute.xlu0 %559
        %v563 = vlaneseq
        %v564 = vshrl.u32 %v563, 7
        %v565 = vsub.s32 0, %v564
        %v566 = vrot.slane %v481, %v565
        %v568 = vmul.f32 %v485, %v566
        %v569 = vmul.f32 %v490, %v566
        %v570 = vmul.f32 %v495, %v566
        %v571 = vmul.f32 %v500, %v566
        %v572 = vmul.f32 %v505, %v566
        %v573 = vmul.f32 %v510, %v566
        %v574 = vmul.f32 %v515, %v566
        %v575 = vmul.f32 %v520, %v566
        %v576 = vmul.f32 %v525, %v566
        %v577 = vmul.f32 %v530, %v566
        %v578 = vmul.f32 %v535, %v566
        %v579 = vmul.f32 %v540, %v566
        %v580 = vmul.f32 %v545, %v566
        %v581 = vmul.f32 %v550, %v566
        %v582 = vmul.f32 %v555, %v566
        %v583 = vmul.f32 %v560, %v566
        %v600 = vunpack.c.l.b16 %v433
        %v601 = vunpack.c.l.b16 %v434
        %v602 = vunpack.c.l.b16 %v435
        %v603 = vunpack.c.l.b16 %v436
        %v604 = vunpack.c.l.b16 %v437
        %v605 = vunpack.c.l.b16 %v438
        %v606 = vunpack.c.l.b16 %v439
        %v607 = vunpack.c.l.b16 %v440
        %v608 = vunpack.c.l.b16 %v441
        %v609 = vunpack.c.l.b16 %v442
        %v610 = vunpack.c.l.b16 %v443
        %v611 = vunpack.c.l.b16 %v444
        %v612 = vunpack.c.l.b16 %v445
        %v613 = vunpack.c.l.b16 %v446
        %v614 = vunpack.c.l.b16 %v447
        %v615 = vunpack.c.l.b16 %v448
        %v616 = vpack.c.b16 %v601, %v600
        %v617 = vpack.c.b16 %v603, %v602
        %v618 = vpack.c.b16 %v605, %v604
        %v619 = vpack.c.b16 %v607, %v606
        %v620 = vpack.c.b16 %v609, %v608
        %v621 = vpack.c.b16 %v611, %v610
        %v622 = vpack.c.b16 %v613, %v612
        %v623 = vpack.c.b16 %v615, %v614
        %v648 = vunpack.c.l.b16 %v449
        %v649 = vunpack.c.l.b16 %v450
        %v650 = vunpack.c.l.b16 %v451
        %v651 = vunpack.c.l.b16 %v452
        %v652 = vunpack.c.l.b16 %v453
        %v653 = vunpack.c.l.b16 %v454
        %v654 = vunpack.c.l.b16 %v455
        %v655 = vunpack.c.l.b16 %v456
        %v656 = vunpack.c.l.b16 %v457
        %v657 = vunpack.c.l.b16 %v458
        %v658 = vunpack.c.l.b16 %v459
        %v659 = vunpack.c.l.b16 %v460
        %v660 = vunpack.c.l.b16 %v461
        %v661 = vunpack.c.l.b16 %v462
        %v662 = vunpack.c.l.b16 %v463
        %v663 = vunpack.c.l.b16 %v464
        %v664 = vpack.c.b16 %v649, %v648
        %v665 = vpack.c.b16 %v651, %v650
        %v666 = vpack.c.b16 %v653, %v652
        %v667 = vpack.c.b16 %v655, %v654
        %v668 = vpack.c.b16 %v657, %v656
        %v669 = vpack.c.b16 %v659, %v658
        %v670 = vpack.c.b16 %v661, %v660
        %v671 = vpack.c.b16 %v663, %v662
        %680 = vmatprep.subr.bf16.mxu0 0
        %681 = vmatpush1.bf16.msra.mxu0 %v664
        %682 = vmatprep.subr.bf16.mxu0 0
        %683 = vmatpush1.bf16.msra.mxu0 %v665
        %684 = vmatprep.subr.bf16.mxu0 0
        %685 = vmatpush1.bf16.msra.mxu0 %v666
        %686 = vmatprep.subr.bf16.mxu0 0
        %687 = vmatpush1.bf16.msra.mxu0 %v667
        %688 = vmatprep.subr.bf16.mxu0 0
        %689 = vmatpush1.bf16.msra.mxu0 %v668
        %690 = vmatprep.subr.bf16.mxu0 0
        %691 = vmatpush1.bf16.msra.mxu0 %v669
        %692 = vmatprep.subr.bf16.mxu0 0
        %693 = vmatpush1.bf16.msra.mxu0 %v670
        %694 = vmatprep.subr.bf16.mxu0 0
        %695 = vmatpush1.bf16.msra.mxu0 %v671
        %696 = vmatprep.subr.bf16.mxu0 0
        %697 = vmatpush1.bf16.msra.mxu0 0
        %698 = vmatprep.subr.bf16.mxu0 0
        %699 = vmatpush1.bf16.msra.mxu0 0
        %700 = vmatprep.subr.bf16.mxu0 0
        %701 = vmatpush1.bf16.msra.mxu0 0
        %702 = vmatprep.subr.bf16.mxu0 0
        %703 = vmatpush1.bf16.msra.mxu0 0
        %704 = vmatprep.subr.bf16.mxu0 0
        %705 = vmatpush1.bf16.msra.mxu0 0
        %706 = vmatprep.subr.bf16.mxu0 0
        %707 = vmatpush1.bf16.msra.mxu0 0
        %708 = vmatprep.subr.bf16.mxu0 0
        %709 = vmatpush1.bf16.msra.mxu0 0
        %710 = vmatprep.subr.bf16.mxu0 0
        %711 = vmatpush1.bf16.msra.mxu0 0
        %712 = vmatprep.mubr.bf16.mxu0 0
        %713 = vmatmul.mubr.bf16.gmra.mrb[0].mxu0 %v616
        %v714 = vpop.f32.mrb[0].mxu0
        %v715 = vadd.f32 %v568, %v714
        %v716 = vpop.f32.mrb[0].mxu0
        %v717 = vpop.f32.mrb[0].mxu0
        %v718 = vadd.f32 %v569, %v717
        %v719 = vpop.f32.mrb[0].mxu0
        %720 = vmatprep.mubr.bf16.mxu0 0
        %721 = vmatmul.mubr.bf16.gmra.mrb[0].mxu0 %v617
        %v722 = vpop.f32.mrb[0].mxu0
        %v723 = vadd.f32 %v570, %v722
        %v724 = vpop.f32.mrb[0].mxu0
        %v725 = vpop.f32.mrb[0].mxu0
        %v726 = vadd.f32 %v571, %v725
        %v727 = vpop.f32.mrb[0].mxu0
        %728 = vmatprep.mubr.bf16.mxu0 0
        %729 = vmatmul.mubr.bf16.gmra.mrb[0].mxu0 %v618
        %v730 = vpop.f32.mrb[0].mxu0
        %v731 = vadd.f32 %v572, %v730
        %v732 = vpop.f32.mrb[0].mxu0
        %v733 = vpop.f32.mrb[0].mxu0
        %v734 = vadd.f32 %v573, %v733
        %v735 = vpop.f32.mrb[0].mxu0
        %736 = vmatprep.mubr.bf16.mxu0 0
        %737 = vmatmul.mubr.bf16.gmra.mrb[0].mxu0 %v619
        %v738 = vpop.f32.mrb[0].mxu0
        %v739 = vadd.f32 %v574, %v738
        %v740 = vpop.f32.mrb[0].mxu0
        %v741 = vpop.f32.mrb[0].mxu0
        %v742 = vadd.f32 %v575, %v741
        %v743 = vpop.f32.mrb[0].mxu0
        %744 = vmatprep.mubr.bf16.mxu0 0
        %745 = vmatmul.mubr.bf16.gmra.mrb[0].mxu0 %v620
        %v746 = vpop.f32.mrb[0].mxu0
        %v747 = vadd.f32 %v576, %v746
        %v748 = vpop.f32.mrb[0].mxu0
        %v749 = vpop.f32.mrb[0].mxu0
        %v750 = vadd.f32 %v577, %v749
        %v751 = vpop.f32.mrb[0].mxu0
        %752 = vmatprep.mubr.bf16.mxu0 0
        %753 = vmatmul.mubr.bf16.gmra.mrb[0].mxu0 %v621
        %v754 = vpop.f32.mrb[0].mxu0
        %v755 = vadd.f32 %v578, %v754
        %v756 = vpop.f32.mrb[0].mxu0
        %v757 = vpop.f32.mrb[0].mxu0
        %v758 = vadd.f32 %v579, %v757
        %v759 = vpop.f32.mrb[0].mxu0
        %760 = vmatprep.mubr.bf16.mxu0 0
        %761 = vmatmul.mubr.bf16.gmra.mrb[0].mxu0 %v622
        %v762 = vpop.f32.mrb[0].mxu0
        %v763 = vadd.f32 %v580, %v762
        %v764 = vpop.f32.mrb[0].mxu0
        %v765 = vpop.f32.mrb[0].mxu0
        %v766 = vadd.f32 %v581, %v765
        %v767 = vpop.f32.mrb[0].mxu0
        %768 = vmatprep.mubr.bf16.mxu0 0
        %769 = vmatmul.mubr.bf16.gmra.mrb[0].mxu0 %v623
        %v770 = vpop.f32.mrb[0].mxu0
        %v771 = vadd.f32 %v582, %v770
        %v772 = vpop.f32.mrb[0].mxu0
        %v773 = vpop.f32.mrb[0].mxu0
        %v774 = vadd.f32 %v583, %v773
        %v775 = vpop.f32.mrb[0].mxu0
        %776 = vdwg.mxu0
        %v777 = vmul.f32 %v715, %v715
        %v778 = vmul.f32 %v718, %v718
        %v779 = vmul.f32 %v723, %v723
        %v780 = vmul.f32 %v726, %v726
        %v781 = vmul.f32 %v731, %v731
        %v782 = vmul.f32 %v734, %v734
        %v783 = vmul.f32 %v739, %v739
        %v784 = vmul.f32 %v742, %v742
        %v785 = vmul.f32 %v747, %v747
        %v786 = vmul.f32 %v750, %v750
        %v787 = vmul.f32 %v755, %v755
        %v788 = vmul.f32 %v758, %v758
        %v789 = vmul.f32 %v763, %v763
        %v790 = vmul.f32 %v766, %v766
        %v791 = vmul.f32 %v771, %v771
        %v792 = vmul.f32 %v774, %v774
        %v793 = vmul.f32 %v715, %v777
        %v794 = vmul.f32 %v718, %v778
        %v795 = vmul.f32 %v723, %v779
        %v796 = vmul.f32 %v726, %v780
        %v797 = vmul.f32 %v731, %v781
        %v798 = vmul.f32 %v734, %v782
        %v799 = vmul.f32 %v739, %v783
        %v800 = vmul.f32 %v742, %v784
        %v801 = vmul.f32 %v747, %v785
        %v802 = vmul.f32 %v750, %v786
        %v803 = vmul.f32 %v755, %v787
        %v804 = vmul.f32 %v758, %v788
        %v805 = vmul.f32 %v763, %v789
        %v806 = vmul.f32 %v766, %v790
        %v807 = vmul.f32 %v771, %v791
        %v808 = vmul.f32 %v774, %v792
        %v809 = vmul.f32 %v793, 0.044715
        %v810 = vmul.f32 %v794, 0.044715
        %v811 = vmul.f32 %v795, 0.044715
        %v812 = vmul.f32 %v796, 0.044715
        %v813 = vmul.f32 %v797, 0.044715
        %v814 = vmul.f32 %v798, 0.044715
        %v815 = vmul.f32 %v799, 0.044715
        %v816 = vmul.f32 %v800, 0.044715
        %v817 = vmul.f32 %v801, 0.044715
        %v818 = vmul.f32 %v802, 0.044715
        %v819 = vmul.f32 %v803, 0.044715
        %v820 = vmul.f32 %v804, 0.044715
        %v821 = vmul.f32 %v805, 0.044715
        %v822 = vmul.f32 %v806, 0.044715
        %v823 = vmul.f32 %v807, 0.044715
        %v824 = vmul.f32 %v808, 0.044715
        %v825 = vadd.f32 %v715, %v809
        %v826 = vadd.f32 %v718, %v810
        %v827 = vadd.f32 %v723, %v811
        %v828 = vadd.f32 %v726, %v812
        %v829 = vadd.f32 %v731, %v813
        %v830 = vadd.f32 %v734, %v814
        %v831 = vadd.f32 %v739, %v815
        %v832 = vadd.f32 %v742, %v816
        %v833 = vadd.f32 %v747, %v817
        %v834 = vadd.f32 %v750, %v818
        %v835 = vadd.f32 %v755, %v819
        %v836 = vadd.f32 %v758, %v820
        %v837 = vadd.f32 %v763, %v821
        %v838 = vadd.f32 %v766, %v822
        %v839 = vadd.f32 %v771, %v823
        %v840 = vadd.f32 %v774, %v824
        %v841 = vmul.f32 %v825, 0.7978846
        %v842 = vmul.f32 %v826, 0.7978846
        %v843 = vmul.f32 %v827, 0.7978846
        %v844 = vmul.f32 %v828, 0.7978846
        %v845 = vmul.f32 %v829, 0.7978846
        %v846 = vmul.f32 %v830, 0.7978846
        %v847 = vmul.f32 %v831, 0.7978846
        %v848 = vmul.f32 %v832, 0.7978846
        %v849 = vmul.f32 %v833, 0.7978846
        %v850 = vmul.f32 %v834, 0.7978846
        %v851 = vmul.f32 %v835, 0.7978846
        %v852 = vmul.f32 %v836, 0.7978846
        %v853 = vmul.f32 %v837, 0.7978846
        %v854 = vmul.f32 %v838, 0.7978846
        %v855 = vmul.f32 %v839, 0.7978846
        %v856 = vmul.f32 %v840, 0.7978846
        %v857 = vtanh.pop %v841
        %v858 = vtanh.pop %v842
        %v859 = vtanh.pop %v843
        %v860 = vtanh.pop %v844
        %v861 = vtanh.pop %v845
        %v862 = vtanh.pop %v846
        %v863 = vtanh.pop %v847
        %v864 = vtanh.pop %v848
        %v865 = vtanh.pop %v849
        %v866 = vtanh.pop %v850
        %v867 = vtanh.pop %v851
        %v868 = vtanh.pop %v852
        %v869 = vtanh.pop %v853
        %v870 = vtanh.pop %v854
        %v871 = vtanh.pop %v855
        %v872 = vtanh.pop %v856
        %v873 = vadd.f32 %v857, 1.0
        %v874 = vadd.f32 %v858, 1.0
        %v875 = vadd.f32 %v859, 1.0
        %v876 = vadd.f32 %v860, 1.0
        %v877 = vadd.f32 %v861, 1.0
        %v878 = vadd.f32 %v862, 1.0
        %v879 = vadd.f32 %v863, 1.0
        %v880 = vadd.f32 %v864, 1.0
        %v881 = vadd.f32 %v865, 1.0
        %v882 = vadd.f32 %v866, 1.0
        %v883 = vadd.f32 %v867, 1.0
        %v884 = vadd.f32 %v868, 1.0
        %v885 = vadd.f32 %v869, 1.0
        %v886 = vadd.f32 %v870, 1.0
        %v887 = vadd.f32 %v871, 1.0
        %v888 = vadd.f32 %v872, 1.0
        %v889 = vmul.f32 %v873, 0.5
        %v890 = vmul.f32 %v874, 0.5
        %v891 = vmul.f32 %v875, 0.5
        %v892 = vmul.f32 %v876, 0.5
        %v893 = vmul.f32 %v877, 0.5
        %v894 = vmul.f32 %v878, 0.5
        %v895 = vmul.f32 %v879, 0.5
        %v896 = vmul.f32 %v880, 0.5
        %v897 = vmul.f32 %v881, 0.5
        %v898 = vmul.f32 %v882, 0.5
        %v899 = vmul.f32 %v883, 0.5
        %v900 = vmul.f32 %v884, 0.5
        %v901 = vmul.f32 %v885, 0.5
        %v902 = vmul.f32 %v886, 0.5
        %v903 = vmul.f32 %v887, 0.5
        %v904 = vmul.f32 %v888, 0.5
        %v905 = vmul.f32 %v715, %v889
        %v906 = vmul.f32 %v718, %v890
        %v907 = vmul.f32 %v723, %v891
        %v908 = vmul.f32 %v726, %v892
        %v909 = vmul.f32 %v731, %v893
        %v910 = vmul.f32 %v734, %v894
        %v911 = vmul.f32 %v739, %v895
        %v912 = vmul.f32 %v742, %v896
        %v913 = vmul.f32 %v747, %v897
        %v914 = vmul.f32 %v750, %v898
        %v915 = vmul.f32 %v755, %v899
        %v916 = vmul.f32 %v758, %v900
        %v917 = vmul.f32 %v763, %v901
        %v918 = vmul.f32 %v766, %v902
        %v919 = vmul.f32 %v771, %v903
        %v920 = vmul.f32 %v774, %v904
        %v921 = vld [vmem:[#allocation2] sm:$0xff]
        %v922 = vld [vmem:[#allocation2 + $0x8] sm:$0xff]
        %v923 = vld [vmem:[#allocation2 + $0x10] sm:$0xff]
        %v924 = vld [vmem:[#allocation2 + $0x18] sm:$0xff]
        %v925 = vld [vmem:[#allocation2 + $0x20] sm:$0xff]
        %v926 = vld [vmem:[#allocation2 + $0x28] sm:$0xff]
        %v927 = vld [vmem:[#allocation2 + $0x30] sm:$0xff]
        %v928 = vld [vmem:[#allocation2 + $0x38] sm:$0xff]
        %v929 = vld [vmem:[#allocation2 + $0x40] sm:$0xff]
        %v930 = vld [vmem:[#allocation2 + $0x48] sm:$0xff]
        %v931 = vld [vmem:[#allocation2 + $0x50] sm:$0xff]
        %v932 = vld [vmem:[#allocation2 + $0x58] sm:$0xff]
        %v933 = vld [vmem:[#allocation2 + $0x60] sm:$0xff]
        %v934 = vld [vmem:[#allocation2 + $0x68] sm:$0xff]
        %v935 = vld [vmem:[#allocation2 + $0x70] sm:$0xff]
        %v936 = vld [vmem:[#allocation2 + $0x78] sm:$0xff]
        %v937 = vpack.c.bf16 %v906, %v905
        %v938 = vpack.c.bf16 %v908, %v907
        %v939 = vpack.c.bf16 %v910, %v909
        %v940 = vpack.c.bf16 %v912, %v911
        %v941 = vpack.c.bf16 %v914, %v913
        %v942 = vpack.c.bf16 %v916, %v915
        %v943 = vpack.c.bf16 %v918, %v917
        %v944 = vpack.c.bf16 %v920, %v919
        %v945 = vld [vmem:[%s338] sm:$0xf]
        %v946 = vld [vmem:[%s338 + $0x4] sm:$0xf]
        %v947 = vld [vmem:[%s338 + $0x8] sm:$0xf]
        %v948 = vld [vmem:[%s338 + $0xc] sm:$0xf]
        %v949 = vld [vmem:[%s338 + $0x10] sm:$0xf]
        %v950 = vld [vmem:[%s338 + $0x14] sm:$0xf]
        %v951 = vld [vmem:[%s338 + $0x18] sm:$0xf]
        %v952 = vld [vmem:[%s338 + $0x1c] sm:$0xf]
        %v953 = vld [vmem:[%s338 + $0x20] sm:$0xf]
        %v954 = vld [vmem:[%s338 + $0x24] sm:$0xf]
        %v955 = vld [vmem:[%s338 + $0x28] sm:$0xf]
        %v956 = vld [vmem:[%s338 + $0x2c] sm:$0xf]
        %v957 = vld [vmem:[%s338 + $0x30] sm:$0xf]
        %v958 = vld [vmem:[%s338 + $0x34] sm:$0xf]
        %v959 = vld [vmem:[%s338 + $0x38] sm:$0xf]
        %v960 = vld [vmem:[%s338 + $0x3c] sm:$0xf]
        %v977 = vunpack.c.l.b16 %v945
        %v978 = vunpack.c.l.b16 %v946
        %v979 = vunpack.c.l.b16 %v947
        %v980 = vunpack.c.l.b16 %v948
        %v981 = vunpack.c.l.b16 %v949
        %v982 = vunpack.c.l.b16 %v950
        %v983 = vunpack.c.l.b16 %v951
        %v984 = vunpack.c.l.b16 %v952
        %v985 = vunpack.c.l.b16 %v953
        %v986 = vunpack.c.l.b16 %v954
        %v987 = vunpack.c.l.b16 %v955
        %v988 = vunpack.c.l.b16 %v956
        %v989 = vunpack.c.l.b16 %v957
        %v990 = vunpack.c.l.b16 %v958
        %v991 = vunpack.c.l.b16 %v959
        %v992 = vunpack.c.l.b16 %v960
        %v993 = vpack.c.b16 %v978, %v977
        %v994 = vpack.c.b16 %v980, %v979
        %v995 = vpack.c.b16 %v982, %v981
        %v996 = vpack.c.b16 %v984, %v983
        %v997 = vpack.c.b16 %v986, %v985
        %v998 = vpack.c.b16 %v988, %v987
        %v999 = vpack.c.b16 %v990, %v989
        %v1000 = vpack.c.b16 %v992, %v991
        %1009 = vmatprep.subr.bf16.mxu0 0
        %1010 = vmatpush1.bf16.msra.mxu0 %v993
        %1011 = vmatprep.subr.bf16.mxu0 0
        %1012 = vmatpush1.bf16.msra.mxu0 %v994
        %1013 = vmatprep.subr.bf16.mxu0 0
        %1014 = vmatpush1.bf16.msra.mxu0 %v995
        %1015 = vmatprep.subr.bf16.mxu0 0
        %1016 = vmatpush1.bf16.msra.mxu0 %v996
        %1017 = vmatprep.subr.bf16.mxu0 0
        %1018 = vmatpush1.bf16.msra.mxu0 %v997
        %1019 = vmatprep.subr.bf16.mxu0 0
        %1020 = vmatpush1.bf16.msra.mxu0 %v998
        %1021 = vmatprep.subr.bf16.mxu0 0
        %1022 = vmatpush1.bf16.msra.mxu0 %v999
        %1023 = vmatprep.subr.bf16.mxu0 0
        %1024 = vmatpush1.bf16.msra.mxu0 %v1000
        %1025 = vmatprep.subr.bf16.mxu0 0
        %1026 = vmatpush1.bf16.msra.mxu0 0
        %1027 = vmatprep.subr.bf16.mxu0 0
        %1028 = vmatpush1.bf16.msra.mxu0 0
        %1029 = vmatprep.subr.bf16.mxu0 0
        %1030 = vmatpush1.bf16.msra.mxu0 0
        %1031 = vmatprep.subr.bf16.mxu0 0
        %1032 = vmatpush1.bf16.msra.mxu0 0
        %1033 = vmatprep.subr.bf16.mxu0 0
        %1034 = vmatpush1.bf16.msra.mxu0 0
        %1035 = vmatprep.subr.bf16.mxu0 0
        %1036 = vmatpush1.bf16.msra.mxu0 0
        %1037 = vmatprep.subr.bf16.mxu0 0
        %1038 = vmatpush1.bf16.msra.mxu0 0
        %1039 = vmatprep.subr.bf16.mxu0 0
        %1040 = vmatpush1.bf16.msra.mxu0 0
        %1041 = vmatprep.mubr.bf16.mxu0 0
        %1042 = vmatmul.mubr.bf16.gmra.mrb[0].mxu0 %v937
        %v1043 = vpop.f32.mrb[0].mxu0
        %v1044 = vadd.f32 0.0, %v1043
        %v1045 = vpop.f32.mrb[0].mxu0
        %v1046 = vpop.f32.mrb[0].mxu0
        %v1047 = vadd.f32 0.0, %v1046
        %v1048 = vpop.f32.mrb[0].mxu0
        %1049 = vmatprep.mubr.bf16.mxu0 0
        %1050 = vmatmul.mubr.bf16.gmra.mrb[0].mxu0 %v938
        %v1051 = vpop.f32.mrb[0].mxu0
        %v1052 = vadd.f32 0.0, %v1051
        %v1053 = vpop.f32.mrb[0].mxu0
        %v1054 = vpop.f32.mrb[0].mxu0
        %v1055 = vadd.f32 0.0, %v1054
        %v1056 = vpop.f32.mrb[0].mxu0
        %1057 = vmatprep.mubr.bf16.mxu0 0
        %1058 = vmatmul.mubr.bf16.gmra.mrb[0].mxu0 %v939
        %v1059 = vpop.f32.mrb[0].mxu0
        %v1060 = vadd.f32 0.0, %v1059
        %v1061 = vpop.f32.mrb[0].mxu0
        %v1062 = vpop.f32.mrb[0].mxu0
        %v1063 = vadd.f32 0.0, %v1062
        %v1064 = vpop.f32.mrb[0].mxu0
        %1065 = vmatprep.mubr.bf16.mxu0 0
        %1066 = vmatmul.mubr.bf16.gmra.mrb[0].mxu0 %v940
        %v1067 = vpop.f32.mrb[0].mxu0
        %v1068 = vadd.f32 0.0, %v1067
        %v1069 = vpop.f32.mrb[0].mxu0
        %v1070 = vpop.f32.mrb[0].mxu0
        %v1071 = vadd.f32 0.0, %v1070
        %v1072 = vpop.f32.mrb[0].mxu0
        %1073 = vmatprep.mubr.bf16.mxu0 0
        %1074 = vmatmul.mubr.bf16.gmra.mrb[0].mxu0 %v941
        %v1075 = vpop.f32.mrb[0].mxu0
        %v1076 = vadd.f32 0.0, %v1075
        %v1077 = vpop.f32.mrb[0].mxu0
        %v1078 = vpop.f32.mrb[0].mxu0
        %v1079 = vadd.f32 0.0, %v1078
        %v1080 = vpop.f32.mrb[0].mxu0
        %1081 = vmatprep.mubr.bf16.mxu0 0
        %1082 = vmatmul.mubr.bf16.gmra.mrb[0].mxu0 %v942
        %v1083 = vpop.f32.mrb[0].mxu0
        %v1084 = vadd.f32 0.0, %v1083
        %v1085 = vpop.f32.mrb[0].mxu0
        %v1086 = vpop.f32.mrb[0].mxu0
        %v1087 = vadd.f32 0.0, %v1086
        %v1088 = vpop.f32.mrb[0].mxu0
        %1089 = vmatprep.mubr.bf16.mxu0 0
        %1090 = vmatmul.mubr.bf16.gmra.mrb[0].mxu0 %v943
        %v1091 = vpop.f32.mrb[0].mxu0
        %v1092 = vadd.f32 0.0, %v1091
        %v1093 = vpop.f32.mrb[0].mxu0
        %v1094 = vpop.f32.mrb[0].mxu0
        %v1095 = vadd.f32 0.0, %v1094
        %v1096 = vpop.f32.mrb[0].mxu0
        %1097 = vmatprep.mubr.bf16.mxu0 0
        %1098 = vmatmul.mubr.bf16.gmra.mrb[0].mxu0 %v944
        %v1099 = vpop.f32.mrb[0].mxu0
        %v1100 = vadd.f32 0.0, %v1099
        %v1101 = vpop.f32.mrb[0].mxu0
        %v1102 = vpop.f32.mrb[0].mxu0
        %v1103 = vadd.f32 0.0, %v1102
        %v1104 = vpop.f32.mrb[0].mxu0
        %1105 = vdwg.mxu0
        %v1106 = vadd.f32 %v921, %v1044
        %v1107 = vadd.f32 %v922, %v1047
        %v1108 = vadd.f32 %v923, %v1052
        %v1109 = vadd.f32 %v924, %v1055
        %v1110 = vadd.f32 %v925, %v1060
        %v1111 = vadd.f32 %v926, %v1063
        %v1112 = vadd.f32 %v927, %v1068
        %v1113 = vadd.f32 %v928, %v1071
        %v1114 = vadd.f32 %v929, %v1076
        %v1115 = vadd.f32 %v930, %v1079
        %v1116 = vadd.f32 %v931, %v1084
        %v1117 = vadd.f32 %v932, %v1087
        %v1118 = vadd.f32 %v933, %v1092
        %v1119 = vadd.f32 %v934, %v1095
        %v1120 = vadd.f32 %v935, %v1100
        %v1121 = vadd.f32 %v936, %v1103
        %1122 = vst [vmem:[#allocation2] sm:$0xff] %v1106
        %1123 = vst [vmem:[#allocation2 + $0x8] sm:$0xff] %v1107
        %1124 = vst [vmem:[#allocation2 + $0x10] sm:$0xff] %v1108
        %1125 = vst [vmem:[#allocation2 + $0x18] sm:$0xff] %v1109
        %1126 = vst [vmem:[#allocation2 + $0x20] sm:$0xff] %v1110
        %1127 = vst [vmem:[#allocation2 + $0x28] sm:$0xff] %v1111
        %1128 = vst [vmem:[#allocation2 + $0x30] sm:$0xff] %v1112
        %1129 = vst [vmem:[#allocation2 + $0x38] sm:$0xff] %v1113
        %1130 = vst [vmem:[#allocation2 + $0x40] sm:$0xff] %v1114
        %1131 = vst [vmem:[#allocation2 + $0x48] sm:$0xff] %v1115
        %1132 = vst [vmem:[#allocation2 + $0x50] sm:$0xff] %v1116
        %1133 = vst [vmem:[#allocation2 + $0x58] sm:$0xff] %v1117
        %1134 = vst [vmem:[#allocation2 + $0x60] sm:$0xff] %v1118
        %1135 = vst [vmem:[#allocation2 + $0x68] sm:$0xff] %v1119
        %1136 = vst [vmem:[#allocation2 + $0x70] sm:$0xff] %v1120
        %1137 = vst [vmem:[#allocation2 + $0x78] sm:$0xff] %v1121
        %p1138 = scmp.eq.s32.totalorder %s32, 3
        %p1139 = scmp.eq.s32.totalorder %s33, 1
        %p1140 = pnand %p1138, %p1139
        %p1141 = pneg %p1140
        // Predicated region
        $region57: #{tpu_custom_call.1} parent=43 // pred_check
          _
        $region58: #{tpu_custom_call.1} parent=43 // pred_check_branch
          %1143 = sbr.rel (%p1140) target = $region60
        $region59: #{tpu_custom_call.1} parent=43 // pred_region
          %v1144 = vld [vmem:[#allocation2] sm:$0xff]
          %v1145 = vld [vmem:[#allocation2 + $0x8] sm:$0xff]
          %v1146 = vld [vmem:[#allocation2 + $0x10] sm:$0xff]
          %v1147 = vld [vmem:[#allocation2 + $0x18] sm:$0xff]
          %v1148 = vld [vmem:[#allocation2 + $0x20] sm:$0xff]
          %v1149 = vld [vmem:[#allocation2 + $0x28] sm:$0xff]
          %v1150 = vld [vmem:[#allocation2 + $0x30] sm:$0xff]
          %v1151 = vld [vmem:[#allocation2 + $0x38] sm:$0xff]
          %v1152 = vld [vmem:[#allocation2 + $0x40] sm:$0xff]
          %v1153 = vld [vmem:[#allocation2 + $0x48] sm:$0xff]
          %v1154 = vld [vmem:[#allocation2 + $0x50] sm:$0xff]
          %v1155 = vld [vmem:[#allocation2 + $0x58] sm:$0xff]
          %v1156 = vld [vmem:[#allocation2 + $0x60] sm:$0xff]
          %v1157 = vld [vmem:[#allocation2 + $0x68] sm:$0xff]
          %v1158 = vld [vmem:[#allocation2 + $0x70] sm:$0xff]
          %v1159 = vld [vmem:[#allocation2 + $0x78] sm:$0xff]
          %v1160 = vld [vmem:[%s5] sm:$0x1]
          %v1162 = vlaneseq
          %v1163 = vshrl.u32 %v1162, 7
          %v1164 = vsub.s32 0, %v1163
          %v1165 = vrot.slane %v1160, %v1164
          %v1167 = vadd.f32 %v1144, %v1165
          %v1168 = vadd.f32 %v1145, %v1165
          %v1169 = vadd.f32 %v1146, %v1165
          %v1170 = vadd.f32 %v1147, %v1165
          %v1171 = vadd.f32 %v1148, %v1165
          %v1172 = vadd.f32 %v1149, %v1165
          %v1173 = vadd.f32 %v1150, %v1165
          %v1174 = vadd.f32 %v1151, %v1165
          %v1175 = vadd.f32 %v1152, %v1165
          %v1176 = vadd.f32 %v1153, %v1165
          %v1177 = vadd.f32 %v1154, %v1165
          %v1178 = vadd.f32 %v1155, %v1165
          %v1179 = vadd.f32 %v1156, %v1165
          %v1180 = vadd.f32 %v1157, %v1165
          %v1181 = vadd.f32 %v1158, %v1165
          %v1182 = vadd.f32 %v1159, %v1165
          %1183 = vst [vmem:[%s388] sm:$0xff] %v1167
          %1184 = vst [vmem:[%s388 + $0x8] sm:$0xff] %v1168
          %1185 = vst [vmem:[%s388 + $0x10] sm:$0xff] %v1169
          %1186 = vst [vmem:[%s388 + $0x18] sm:$0xff] %v1170
          %1187 = vst [vmem:[%s388 + $0x20] sm:$0xff] %v1171
          %1188 = vst [vmem:[%s388 + $0x28] sm:$0xff] %v1172
          %1189 = vst [vmem:[%s388 + $0x30] sm:$0xff] %v1173
          %1190 = vst [vmem:[%s388 + $0x38] sm:$0xff] %v1174
          %1191 = vst [vmem:[%s388 + $0x40] sm:$0xff] %v1175
          %1192 = vst [vmem:[%s388 + $0x48] sm:$0xff] %v1176
          %1193 = vst [vmem:[%s388 + $0x50] sm:$0xff] %v1177
          %1194 = vst [vmem:[%s388 + $0x58] sm:$0xff] %v1178
          %1195 = vst [vmem:[%s388 + $0x60] sm:$0xff] %v1179
          %1196 = vst [vmem:[%s388 + $0x68] sm:$0xff] %v1180
          %1197 = vst [vmem:[%s388 + $0x70] sm:$0xff] %v1181
          %1198 = vst [vmem:[%s388 + $0x78] sm:$0xff] %v1182
        $region60: #{tpu_custom_call.1} parent=43 // pred_fallthru
          _
        %s1199 = sand.u32 %s210, 1
        %s1200 = scalar_lea.sflag [#allocation5], %s1199
        %s1201 = sand.u32 %s210, 1
        %s1202 = smul.addr %s1201, 128
        %s1203 = scalar_lea.vmem [#allocation8], %s1202
        // Predicated region
        $region61: #{tpu_custom_call.1} parent=43 // pred_check
          %p1204 = pneg %p220
        $region62: #{tpu_custom_call.1} parent=43 // pred_check_branch
          %1206 = sbr.rel (%p1204) target = $region64
        $region63: #{tpu_custom_call.1} parent=43 // pred_region
          %s1207 = smul.u32 16, %s31
          %s1209 = ssub.s32 2048, 2048
          %1210 = vsyncadd %s1200, %s1209
          %s1211 = smul.addr %s1207, 128
          %s1212 = scalar_lea.hbm %s6, %s1211
          %s1213 = sshll.u32 %s1203, 4
          %s1214 = int_to_ptr.vmem [resolvable:$true] %s1213
          %1219 = dma.vmem_to_hbm [thread:$0]  %s1214, 2048, %s1212, %s1200, 128, 128, 8
        $region64: #{tpu_custom_call.1} parent=43 // pred_fallthru
          _
      $region44: #{tpu_custom_call.1} parent=5 // pred_fallthru
        _
      %p1220 = scmp.le.s32.totalorder 2, %s21
      // Predicated region
      $region65: #{tpu_custom_call.1} parent=5 // pred_check
        %p1221 = pneg %p1220
      $region66: #{tpu_custom_call.1} parent=5 // pred_check_branch
        %1223 = sbr.rel (%p1221) target = $region68
      $region67: #{tpu_custom_call.1} parent=5 // pred_region
        %s1224 = ssub.s32 %s21, 2
        // Predicated region
        $region69: #{tpu_custom_call.1} parent=67 // pred_check
          %p1225 = pneg %p226
        $region70: #{tpu_custom_call.1} parent=67 // pred_check_branch
          %1227 = sbr.rel (%p1225) target = $region72
        $region71: #{tpu_custom_call.1} parent=67 // pred_region
          %s1228 = sand.u32 %s211, 1
          %s1229 = scalar_lea.sflag [#allocation5], %s1228
          %s1230 = sand.u32 %s211, 1
          %s1231 = smul.addr %s1230, 128
          %s1232 = scalar_lea.vmem [#allocation8], %s1231
          %1233 = dma.done %s1229, 2048
        $region72: #{tpu_custom_call.1} parent=67 // pred_fallthru
          _
      $region68: #{tpu_custom_call.1} parent=5 // pred_fallthru
        _
    $region6: #{tpu_custom_call.1} parent=1 // loop_footer
      %s25 = sadd.s32 1, %s21
    $region7: #{tpu_custom_call.1} parent=1 // loop_footer_branch
      %20 = sbr.rel target = $region3
    $region8: #{tpu_custom_call.1} parent=1 // loop_exit
      _
    %1234 = vsyncpa [#allocation4], 1
    %s1235 = scalar_lea.sflag [#allocation4], 1
    %1236 = vsyncpa %s1235, 1
    %1237 = vsyncpa [#allocation7], 1
    %s1238 = scalar_lea.sflag [#allocation7], 1
    %1239 = vsyncpa %s1238, 1
    %1240 = vsyncpa [#allocation5], 1
    %s1241 = scalar_lea.sflag [#allocation5], 1
    %1242 = vsyncpa %s1241, 1

</llo_original>
